<compile_context>
chip_gen: v5e
topology: v5e:2x2
jax: 0.10.0
libtpu: 0.0.40
codegen_flags: <defaults>
</compile_context>

<pallas_src>
import functools

import jax
import jax.numpy as jnp
from jax.experimental import pallas as pl
from jax.experimental.pallas import tpu as pltpu

BN_EPS = 1e-5
VMEM_LIMIT = 48 * 1024 * 1024   # below v7x physical VMEM, above v5e/v6e defaults
MAX_TK = 2304                   # K tile cap (multiple of 256 -> full MXU feeds)


def _round_up(x, m):
    return (x + m - 1) // m * m


# ----------------------------- Pallas kernels ------------------------------
# Fused matmul (bf16 operands, f32 accumulate) + BatchNorm scale/shift
# + optional residual add + optional ReLU.
# Grid: (branch, M tiles, Cout tiles, K tiles); K is the last, "arbitrary"
# axis with a resident f32 accumulator.

def _matmul_bn_kernel(a_ref, b_ref, scale_ref, shift_ref, o_ref, acc_ref, *, relu):
    k = pl.program_id(3)

    @pl.when(k == 0)
    def _():
        acc_ref[...] = jnp.zeros_like(acc_ref)

    acc_ref[...] += jnp.dot(a_ref[...], b_ref[...],
                            preferred_element_type=jnp.float32)

    @pl.when(k == pl.num_programs(3) - 1)
    def _():
        r = acc_ref[...] * scale_ref[...] + shift_ref[...]
        if relu:
            r = jnp.maximum(r, 0.0)
        o_ref[...] = r.astype(o_ref.dtype)


def _matmul_bn_res_kernel(a_ref, b_ref, scale_ref, shift_ref, r_ref, o_ref,
                          acc_ref, *, relu):
    k = pl.program_id(3)

    @pl.when(k == 0)
    def _():
        acc_ref[...] = jnp.zeros_like(acc_ref)

    acc_ref[...] += jnp.dot(a_ref[...], b_ref[...],
                            preferred_element_type=jnp.float32)

    @pl.when(k == pl.num_programs(3) - 1)
    def _():
        r = (acc_ref[...] * scale_ref[...] + shift_ref[...]
             + r_ref[...].astype(jnp.float32))
        if relu:
            r = jnp.maximum(r, 0.0)
        o_ref[...] = r.astype(o_ref.dtype)


# ------------------------------ kernel wrapper ------------------------------

def _tile_m(M):
    if M >= 128:
        return _round_up(M, 128), 128
    Mpad = _round_up(M, 8)
    return Mpad, Mpad


def _pick_tk(K):
    # K is always a multiple of 128 here; cap tiles at MAX_TK.
    if K <= MAX_TK:
        return K
    s = 2
    while K % s != 0 or K // s > MAX_TK:
        s += 1
    return K // s


def matmul_bn_act_pair(a, b, scale, shift, residual=None, relu=True):
    """out[br] = act((a[br] @ b[br]) * scale[br] + shift[br] [+ residual[br]]).

    a:        (2, M, K)  bf16  im2col patches per branch
    b:        (2, K, C)  bf16  weights per branch (C, K already lane-padded)
    scale:    (2, 1, C)  f32   folded BN scale
    shift:    (2, 1, C)  f32   folded BN shift
    residual: (2, M, C)  bf16 or None
    returns   (2, M, C)  bf16
    """
    _, M, K = a.shape
    C = b.shape[2]
    Mpad, tm = _tile_m(M)
    if Mpad != M:
        a = jnp.pad(a, ((0, 0), (0, Mpad - M), (0, 0)))
        if residual is not None:
            residual = jnp.pad(residual, ((0, 0), (0, Mpad - M), (0, 0)))

    tn = min(C, 256)
    tk = _pick_tk(K)
    grid = (2, Mpad // tm, C // tn, K // tk)

    in_specs = [
        pl.BlockSpec((None, tm, tk), lambda br, i, j, k: (br, i, k)),   # patches
        pl.BlockSpec((None, tk, tn), lambda br, i, j, k: (br, k, j)),   # weights
        pl.BlockSpec((None, 1, tn), lambda br, i, j, k: (br, 0, j)),    # BN scale
        pl.BlockSpec((None, 1, tn), lambda br, i, j, k: (br, 0, j)),    # BN shift
    ]
    args = [a, b, scale, shift]
    if residual is not None:
        in_specs.append(pl.BlockSpec((None, tm, tn), lambda br, i, j, k: (br, i, j)))
        args.append(residual)
        kernel = functools.partial(_matmul_bn_res_kernel, relu=relu)
    else:
        kernel = functools.partial(_matmul_bn_kernel, relu=relu)

    out = pl.pallas_call(
        kernel,
        out_shape=jax.ShapeDtypeStruct((2, Mpad, C), jnp.bfloat16),
        grid=grid,
        in_specs=in_specs,
        out_specs=pl.BlockSpec((None, tm, tn), lambda br, i, j, k: (br, i, j)),
        scratch_shapes=[pltpu.VMEM((tm, tn), jnp.float32)],
        compiler_params=pltpu.CompilerParams(
            dimension_semantics=("parallel", "parallel", "parallel", "arbitrary"),
            vmem_limit_bytes=VMEM_LIMIT,
        ),
    )(*args)
    return out[:, :M, :]


# ------------------------------ conv glue (jnp) ------------------------------
# TODO(synk): im2col patches are still materialized by XLA before the kernel
# (now in bf16 + K-tiled); a fully fused per-tap accumulation inside the kernel
# would remove this HBM round-trip at large resolutions.

def _im2col(x, kh, kw, stride, pad):
    """x: (B, H, W, C) -> patches (B*Ho*Wo, kh*kw*C) in (kh, kw, C) order."""
    B, H, W, C = x.shape
    Ho = (H + 2 * pad - kh) // stride + 1
    Wo = (W + 2 * pad - kw) // stride + 1
    xp = jnp.pad(x, ((0, 0), (pad, pad), (pad, pad), (0, 0)))
    cols = []
    for dh in range(kh):
        for dw in range(kw):
            cols.append(
                xp[:, dh:dh + stride * (Ho - 1) + 1:stride,
                      dw:dw + stride * (Wo - 1) + 1:stride, :]
            )
    patches = jnp.stack(cols, axis=3)               # (B, Ho, Wo, kh*kw, C)
    return patches.reshape(B * Ho * Wo, kh * kw * C), (Ho, Wo)


def _prep_weight_bn(w, bn, cin_pad, cout_pad, k_pad):
    """PyTorch (Cout,Cin,kh,kw) conv weight + BN -> bf16 (k_pad, cout_pad) matrix
    and f32 folded scale/shift (cout_pad,)."""
    Cout, Cin, kh, kw = w.shape
    if Cin < cin_pad:                               # zero-pad input channels
        w = jnp.pad(w, ((0, 0), (0, cin_pad - Cin), (0, 0), (0, 0)))
    b = jnp.transpose(w, (2, 3, 1, 0)).reshape(kh * kw * cin_pad, Cout)
    gamma, beta, mean, var = bn
    scale = gamma / jnp.sqrt(var + BN_EPS)
    shift = beta - mean * scale
    if cout_pad > Cout:                             # lane-dense output channels
        b = jnp.pad(b, ((0, 0), (0, cout_pad - Cout)))
        scale = jnp.pad(scale, (0, cout_pad - Cout))
        shift = jnp.pad(shift, (0, cout_pad - Cout))
    if k_pad > b.shape[0]:                          # aligned contraction dim
        b = jnp.pad(b, ((0, k_pad - b.shape[0]), (0, 0)))
    return (b.astype(jnp.bfloat16),
            scale.astype(jnp.float32),
            shift.astype(jnp.float32))


def conv_bn_act_pair(x2, w_r, bn_r, w_d, bn_d, stride, pad, relu=True,
                     residual2=None):
    """Fused Conv+BN(+res)(+ReLU) for BOTH branches in one pallas_call.

    x2: (2N, H, W, Cx) bf16, batch-stacked [rgb ; depth].
    w_r/w_d: PyTorch-layout weights (Cout, Cin, kh, kw), Cin <= Cx.
    residual2: (2N, Ho, Wo, Cout_pad) bf16 or None.
    Returns (2N, Ho, Wo, Cout_pad) bf16 (Cout zero-padded up to >=128 lanes).
    """
    twoN, H, W, Cx = x2.shape
    N = twoN // 2
    Cout, _, kh, kw = w_r.shape
    cout_pad = max(_round_up(Cout, 128), 128)
    K = kh * kw * Cx
    k_pad = _round_up(K, 128)

    a, (Ho, Wo) = _im2col(x2, kh, kw, stride, pad)      # (2N*Ho*Wo, K) bf16
    if k_pad > K:
        a = jnp.pad(a, ((0, 0), (0, k_pad - K)))
    M = N * Ho * Wo
    a = a.reshape(2, M, k_pad)

    b_r, sc_r, sh_r = _prep_weight_bn(w_r, bn_r, Cx, cout_pad, k_pad)
    b_d, sc_d, sh_d = _prep_weight_bn(w_d, bn_d, Cx, cout_pad, k_pad)
    b = jnp.stack([b_r, b_d], axis=0)                   # (2, k_pad, cout_pad)
    scale = jnp.stack([sc_r, sc_d], axis=0).reshape(2, 1, cout_pad)
    shift = jnp.stack([sh_r, sh_d], axis=0).reshape(2, 1, cout_pad)

    res = None
    if residual2 is not None:
        res = residual2.reshape(2, M, cout_pad)

    out = matmul_bn_act_pair(a, b, scale, shift, residual=res, relu=relu)
    return out.reshape(2 * N, Ho, Wo, cout_pad)


def maxpool_3x3_s2(x):
    """MaxPool2d(kernel_size=3, stride=2, padding=1) as a jnp max tree (NHWC)."""
    B, H, W, C = x.shape
    Ho = (H + 2 - 3) // 2 + 1
    Wo = (W + 2 - 3) // 2 + 1
    neg = float(jnp.finfo(x.dtype).min)
    xp = jnp.pad(x, ((0, 0), (1, 1), (1, 1), (0, 0)), constant_values=neg)
    out = None
    for dh in range(3):
        for dw in range(3):
            s = xp[:, dh:dh + 2 * (Ho - 1) + 1:2, dw:dw + 2 * (Wo - 1) + 1:2, :]
            out = s if out is None else jnp.maximum(out, s)
    return out


# --------------------------- parameter construction -------------------------

def kaiming_conv(key, cout, cin, kh, kw):
    # nn.init.kaiming_normal_(mode='fan_out', nonlinearity='relu')
    std = (2.0 / (kh * kw * cout)) ** 0.5
    return jax.random.normal(key, (cout, cin, kh, kw), jnp.float32) * std


def bn_params(c):
    # (gamma, beta, running_mean, running_var) — PyTorch defaults after init
    return (jnp.ones((c,), jnp.float32), jnp.zeros((c,), jnp.float32),
            jnp.zeros((c,), jnp.float32), jnp.ones((c,), jnp.float32))


def make_basic_block_params(key, inplanes, planes, stride):
    k1, k2, k3 = jax.random.split(key, 3)
    p = {
        "conv1": kaiming_conv(k1, planes, inplanes, 3, 3),
        "bn1": bn_params(planes),
        "conv2": kaiming_conv(k2, planes, planes, 3, 3),
        "bn2": bn_params(planes),
        "stride": stride,
        "downsample": None,
    }
    if stride != 1 or inplanes != planes:
        p["downsample"] = {
            "conv": kaiming_conv(k3, planes, inplanes, 1, 1),
            "bn": bn_params(planes),
        }
    return p


def make_branch_params(key, in_ch, layers=(2, 2, 2, 2)):
    keys = jax.random.split(key, 1 + sum(layers))
    params = {"conv1": kaiming_conv(keys[0], 64, in_ch, 7, 7), "bn1": bn_params(64)}
    inplanes = 64
    ki = 1
    cfg = [(64, layers[0], 1), (128, layers[1], 2),
           (256, layers[2], 2), (512, layers[3], 2)]
    for li, (planes, blocks, stride) in enumerate(cfg, start=1):
        layer = []
        for bi in range(blocks):
            s = stride if bi == 0 else 1
            layer.append(make_basic_block_params(keys[ki], inplanes, planes, s))
            ki += 1
            inplanes = planes
        params[f"layer{li}"] = layer
    return params


# --------------------------------- forward ----------------------------------

def basic_block_forward_pair(x2, pr, pd):
    stride = pr["stride"]
    out = conv_bn_act_pair(x2, pr["conv1"], pr["bn1"], pd["conv1"], pd["bn1"],
                           stride=stride, pad=1, relu=True)
    if pr["downsample"] is not None:
        identity = conv_bn_act_pair(
            x2, pr["downsample"]["conv"], pr["downsample"]["bn"],
            pd["downsample"]["conv"], pd["downsample"]["bn"],
            stride=stride, pad=0, relu=False)
    else:
        identity = x2
    # conv2 + bn2 + residual add + relu fused in one Pallas kernel
    out = conv_bn_act_pair(out, pr["conv2"], pr["bn2"], pd["conv2"], pd["bn2"],
                           stride=1, pad=1, relu=True, residual2=identity)
    return out


def resnet_forward(params, x_nchw, depth_nchw):
    x = jnp.transpose(x_nchw, (0, 2, 3, 1))        # NCHW -> NHWC
    d = jnp.transpose(depth_nchw, (0, 2, 3, 1))    # NCHW -> NHWC
    # Zero-pad the depth input channels so both branches stack along batch;
    # the depth stem weight is zero-padded to match, so semantics are exact.
    if d.shape[-1] < x.shape[-1]:
        d = jnp.pad(d, ((0, 0), (0, 0), (0, 0), (0, x.shape[-1] - d.shape[-1])))
    x2 = jnp.concatenate([x, d], axis=0).astype(jnp.bfloat16)   # (2N, H, W, 3)

    pr, pd = params["rgb"], params["depth"]
    x2 = conv_bn_act_pair(x2, pr["conv1"], pr["bn1"], pd["conv1"], pd["bn1"],
                          stride=2, pad=3, relu=True)
    x2 = maxpool_3x3_s2(x2)
    for li in range(1, 5):
        for br, bd in zip(pr[f"layer{li}"], pd[f"layer{li}"]):
            x2 = basic_block_forward_pair(x2, br, bd)

    N = x_nchw.shape[0]
    xf = x2[:N].astype(jnp.float32)                # layer4 output has 512 lanes
    df = x2[N:].astype(jnp.float32)
    out = (xf + df) * 0.5                          # trivial; fused by XLA
    return jnp.transpose(out, (0, 3, 1, 2))        # back to NCHW


# ----------------------------------- main ------------------------------------

if __name__ == "__main__":
    key = jax.random.PRNGKey(0)
    kparams, kx, kd = jax.random.split(key, 3)
    k_rgb, k_depth = jax.random.split(kparams)

    params = {
        "rgb": make_branch_params(k_rgb, in_ch=3),
        "depth": make_branch_params(k_depth, in_ch=1),
    }

    # Small shapes consistent with the module: RGB 3-channel, depth 1-channel.
    x = jax.random.normal(kx, (2, 3, 32, 32), jnp.float32)
    depth = jax.random.normal(kd, (2, 1, 32, 32), jnp.float32)

    out = resnet_forward(params, x, depth)
    out = jax.block_until_ready(out)
    assert out.shape == (2, 512, 1, 1), out.shape
    assert bool(jnp.all(jnp.isfinite(out)))
    print("KERNEL_OK")
</pallas_src>

<mosaic_0001>
module attributes {stable_mosaic.version = 11 : i64} {
  func.func @_matmul_bn_kernel(%arg0: i32, %arg1: i32, %arg2: i32, %arg3: i32, %arg4: memref<1x128x256xbf16, #tpu.memory_space<vmem>>, %arg5: memref<1x256x128xbf16, #tpu.memory_space<vmem>>, %arg6: memref<1x1x128xf32, #tpu.memory_space<vmem>>, %arg7: memref<1x1x128xf32, #tpu.memory_space<vmem>>, %arg8: memref<1x128x128xbf16, #tpu.memory_space<vmem>>, %arg9: memref<128x128xf32, #tpu.memory_space<vmem>>) attributes {dimension_semantics = [#tpu.dimension_semantics<parallel>, #tpu.dimension_semantics<parallel>, #tpu.dimension_semantics<parallel>, #tpu.dimension_semantics<arbitrary>], iteration_bounds = array<i64: 2, 4, 1, 1>, scalar_prefetch = 0 : i64, scratch_operands = 1 : i64, tpu.core_type = #tpu.core_type<tc>, window_params = [{transform_indices = @transform_0, window_bounds = array<i64: 1, 128, 256>}, {transform_indices = @transform_1, window_bounds = array<i64: 1, 256, 128>}, {transform_indices = @transform_2, window_bounds = array<i64: 1, 1, 128>}, {transform_indices = @transform_3, window_bounds = array<i64: 1, 1, 128>}, {transform_indices = @transform_4, window_bounds = array<i64: 1, 128, 128>}]} {
    %c0_i32 = arith.constant 0 : i32
    %0 = arith.cmpi eq, %arg3, %c0_i32 : i32
    %1 = arith.extui %0 : i1 to i32
    %c0_i32_0 = arith.constant 0 : i32
    %2 = arith.cmpi ne, %1, %c0_i32_0 : i32
    scf.if %2 {
      %cst_12 = arith.constant 0.000000e+00 : f32
      %14 = vector.broadcast %cst_12 : f32 to vector<128x128xf32>
      %c0_13 = arith.constant 0 : index
      %c0_14 = arith.constant 0 : index
      %15 = vector.load %arg9[%c0_13, %c0_14] : memref<128x128xf32, #tpu.memory_space<vmem>>, vector<128x128xf32>
      tpu.vector_store %arg9[%c0_13, %c0_14], %14 {strides = array<i32>} : memref<128x128xf32, #tpu.memory_space<vmem>>, vector<128x128xf32>,
    } else {
    }
    %c0 = arith.constant 0 : index
    %c0_1 = arith.constant 0 : index
    %3 = vector.load %arg9[%c0, %c0_1] : memref<128x128xf32, #tpu.memory_space<vmem>>, vector<128x128xf32>
    %c0_2 = arith.constant 0 : index
    %c0_3 = arith.constant 0 : index
    %c0_4 = arith.constant 0 : index
    %4 = vector.load %arg4[%c0_2, %c0_3, %c0_4] : memref<1x128x256xbf16, #tpu.memory_space<vmem>>, vector<1x128x256xbf16>
    %5 = vector.shape_cast %4 : vector<1x128x256xbf16> to vector<128x256xbf16>
    %c0_5 = arith.constant 0 : index
    %c0_6 = arith.constant 0 : index
    %c0_7 = arith.constant 0 : index
    %6 = vector.load %arg5[%c0_5, %c0_6, %c0_7] : memref<1x256x128xbf16, #tpu.memory_space<vmem>>, vector<1x256x128xbf16>
    %7 = vector.shape_cast %6 : vector<1x256x128xbf16> to vector<256x128xbf16>
    %cst = arith.constant dense<0.000000e+00> : vector<128x128xf32>
    %8 = tpu.matmul %5, %7, %cst {dimension_numbers = #tpu.dot_dimension_numbers<[1], [0], [0], [1], [0, 0, 1, 1], [], []>} : vector<128x256xbf16>, vector<256x128xbf16>, vector<128x128xf32> -> vector<128x128xf32>
    %9 = arith.addf %3, %8 : vector<128x128xf32>
    %c0_8 = arith.constant 0 : index
    %c0_9 = arith.constant 0 : index
    %10 = vector.load %arg9[%c0_8, %c0_9] : memref<128x128xf32, #tpu.memory_space<vmem>>, vector<128x128xf32>
    tpu.vector_store %arg9[%c0_8, %c0_9], %9 {strides = array<i32>} : memref<128x128xf32, #tpu.memory_space<vmem>>, vector<128x128xf32>,
    %c0_i32_10 = arith.constant 0 : i32
    %11 = arith.cmpi eq, %arg3, %c0_i32_10 : i32
    %12 = arith.extui %11 : i1 to i32
    %c0_i32_11 = arith.constant 0 : i32
    %13 = arith.cmpi ne, %12, %c0_i32_11 : i32
    scf.if %13 {
      %c0_12 = arith.constant 0 : index
      %c0_13 = arith.constant 0 : index
      %14 = vector.load %arg9[%c0_12, %c0_13] : memref<128x128xf32, #tpu.memory_space<vmem>>, vector<128x128xf32>
      %c0_14 = arith.constant 0 : index
      %c0_15 = arith.constant 0 : index
      %c0_16 = arith.constant 0 : index
      %15 = vector.load %arg6[%c0_14, %c0_15, %c0_16] : memref<1x1x128xf32, #tpu.memory_space<vmem>>, vector<1x1x128xf32>
      %16 = vector.shape_cast %15 : vector<1x1x128xf32> to vector<1x128xf32>
      %17 = vector.broadcast %16 : vector<1x128xf32> to vector<128x128xf32>
      %18 = arith.mulf %14, %17 : vector<128x128xf32>
      %c0_17 = arith.constant 0 : index
      %c0_18 = arith.constant 0 : index
      %c0_19 = arith.constant 0 : index
      %19 = vector.load %arg7[%c0_17, %c0_18, %c0_19] : memref<1x1x128xf32, #tpu.memory_space<vmem>>, vector<1x1x128xf32>
      %20 = vector.shape_cast %19 : vector<1x1x128xf32> to vector<1x128xf32>
      %21 = vector.broadcast %20 : vector<1x128xf32> to vector<128x128xf32>
      %22 = arith.addf %18, %21 : vector<128x128xf32>
      %cst_20 = arith.constant 0.000000e+00 : f32
      %23 = vector.broadcast %cst_20 : f32 to vector<128x128xf32>
      %24 = arith.maximumf %22, %23 : vector<128x128xf32>
      %25 = arith.truncf %24 : vector<128x128xf32> to vector<128x128xbf16>
      %c0_21 = arith.constant 0 : index
      %c0_22 = arith.constant 0 : index
      %c0_23 = arith.constant 0 : index
      %26 = vector.load %arg8[%c0_21, %c0_22, %c0_23] : memref<1x128x128xbf16, #tpu.memory_space<vmem>>, vector<1x128x128xbf16>
      %27 = vector.shape_cast %26 : vector<1x128x128xbf16> to vector<128x128xbf16>
      %28 = vector.shape_cast %25 : vector<128x128xbf16> to vector<1x128x128xbf16>
      tpu.vector_store %arg8[%c0_21, %c0_22, %c0_23], %28 {strides = array<i32>} : memref<1x128x128xbf16, #tpu.memory_space<vmem>>, vector<1x128x128xbf16>,
    } else {
    }
    return
  }
  func.func @transform_0(%arg0: i32, %arg1: i32, %arg2: i32, %arg3: i32) -> (i32, i32, i32) {
    %c0_i32 = arith.constant 0 : i32
    return %arg0, %arg1, %arg3 : i32, i32, i32
  }
  func.func @transform_1(%arg0: i32, %arg1: i32, %arg2: i32, %arg3: i32) -> (i32, i32, i32) {
    %c0_i32 = arith.constant 0 : i32
    return %arg0, %arg3, %arg2 : i32, i32, i32
  }
  func.func @transform_2(%arg0: i32, %arg1: i32, %arg2: i32, %arg3: i32) -> (i32, i32, i32) {
    %c0_i32 = arith.constant 0 : i32
    %c0_i32_0 = arith.constant 0 : i32
    return %arg0, %c0_i32, %arg2 : i32, i32, i32
  }
  func.func @transform_3(%arg0: i32, %arg1: i32, %arg2: i32, %arg3: i32) -> (i32, i32, i32) {
    %c0_i32 = arith.constant 0 : i32
    %c0_i32_0 = arith.constant 0 : i32
    return %arg0, %c0_i32, %arg2 : i32, i32, i32
  }
  func.func @transform_4(%arg0: i32, %arg1: i32, %arg2: i32, %arg3: i32) -> (i32, i32, i32) {
    %c0_i32 = arith.constant 0 : i32
    return %arg0, %arg1, %arg2 : i32, i32, i32
  }
}

</mosaic_0001>

<llo_original>
// kernel: tpu_custom_call.1
$region0: #{tpu_custom_call.1}
  #allocation0 [shape = 'u32[]', space=smem, size = 0x4, offset = 0x4, fixed_abs, tag = 'smem constant byte address 0x4 - core index']
  #allocation1 [shape = 'u32[72,128]{1,0:T(1,128)}', space=vmem, size = 0x9000, scoped, tag = 'internal scratch']
  #allocation2 [shape = 'f32[128,128]{1,0:T(8,128)}', space=vmem, size = 0x10000, scoped, tag = 'scratch operand']
  %s0 = inlined_call_operand.hbm [shape: bf16[2,512,256], index: 0, kind: input, shape index: {}]
  %s1 = inlined_call_operand.hbm [shape: bf16[2,256,128], index: 1, kind: input, shape index: {}]
  %s2 = inlined_call_operand.hbm [shape: f32[2,1,128], index: 2, kind: input, shape index: {}]
  %s3 = inlined_call_operand.vmem [shape: f32[2,1,128], index: 3, kind: input, shape index: {}]
  %s4 = inlined_call_operand.hbm [shape: bf16[2,512,128], index: 4, kind: output, shape index: {}]
  %s5 = sld [smem:[#allocation0]]
  $region69: #{tpu_custom_call.1} parent=0
    _
  %s7 = ssub.s32 1, %s5
  %s8 = scalar_select 0, %s7, %s5
  $region1: #{tpu_custom_call.1} parent=0
    #allocation3 [shape = 'u8[131072]{0}', space=vmem, size = 0x20000, scoped, tag = 'input window, operand 0']
    #allocation4 [shape = 's32[2]{0}', space=sflag, size = 0x8, scoped, tag = 'scoped memory for tpu_custom_call.1']
    #allocation5 [shape = 's32[2]{0}', space=sflag, size = 0x8, scoped, tag = 'scoped memory for tpu_custom_call.1']
    #allocation6 [shape = 'u8[131072]{0}', space=vmem, size = 0x20000, scoped, tag = 'input window, operand 1']
    #allocation7 [shape = 's32[2]{0}', space=sflag, size = 0x8, scoped, tag = 'scoped memory for tpu_custom_call.1']
    #allocation8 [shape = 'u8[1024]{0}', space=vmem, size = 0x400, scoped, tag = 'input window, operand 2']
    #allocation9 [shape = 'u8[65536]{0}', space=vmem, size = 0x10000, scoped, tag = 'output window, operand 0']
    %9 = vsyncpa [#allocation4], 0
    %s10 = scalar_lea.sflag [#allocation4], 1
    %11 = vsyncpa %s10, 0
    %12 = vsyncpa [#allocation7], 0
    %s13 = scalar_lea.sflag [#allocation7], 1
    %14 = vsyncpa %s13, 0
    %15 = vsyncpa [#allocation5], 0
    %s16 = scalar_lea.sflag [#allocation5], 1
    %17 = vsyncpa %s16, 0
    loop: start=0, step=1, limit=10
    $region2: #{tpu_custom_call.1} parent=1 // loop_pre_header
      _
    $region3: #{tpu_custom_call.1} parent=1 // loop_header
      %s19 = sphi 0, %s23
      %p20 = scmp.ge.s32.totalorder %s19, 10
      %s26 = sphi 0, %s52
      %s27 = sphi 0, %s48
      %s28 = sphi 0, %s44
      %s29 = sphi 0, %s40
      %s30 = sphi 0, %s26
      %s31 = sphi 0, %s27
      %s32 = sphi 0, %s28
      %s33 = sphi 0, %s29
      %s34 = sphi 0, %s30
      %s35 = sphi 0, %s31
      %s36 = sphi 0, %s32
      %s37 = sphi 0, %s33
      %s59 = sphi 0, %s61
      %s62 = sphi 0, %s59
      %s63 = sphi 0, %s62
      %s79 = sphi 0, %s63
      %s89 = sphi 0, %s91
      %s92 = sphi 0, %s89
      %s93 = sphi 0, %s92
      %s109 = sphi 0, %s93
      %s117 = sphi 0, %s119
      %s120 = sphi 0, %s117
      %s121 = sphi 0, %s120
      %s137 = sphi 0, %s121
      %s145 = sphi 0, %s147
      %s148 = sphi 0, %s145
      %s149 = sphi 0, %s148
      %s165 = sphi 0, %s149
      %s175 = sphi 0, %s177
      %s178 = sphi 0, %s175
      %s179 = sphi 0, %s178
      %s195 = sphi 0, %s179
    $region4: #{tpu_custom_call.1} parent=1 // loop_header_branch
      %22 = sbr.rel (%p20) target = $region8
    $region5: #{tpu_custom_call.1} parent=1 // loop_body
      %s24 = ssub.s32 %s19, 1
      %s25 = ssub.s32 %s19, 2
      %s38 = sadd.s32 1, %s29
      %p39 = scmp.ge.s32.totalorder %s38, 1
      %s40 = scalar_select %p39, 0, %s38
      %s41 = sadd.s32 1, %s28
      %s42 = scalar_select %p39, %s41, %s28
      %p43 = scmp.ge.s32.totalorder %s42, 1
      %s44 = scalar_select %p43, 0, %s42
      %s45 = sadd.s32 1, %s27
      %s46 = scalar_select %p43, %s45, %s27
      %p47 = scmp.ge.s32.totalorder %s46, 4
      %s48 = scalar_select %p47, 0, %s46
      %s49 = sadd.s32 1, %s26
      %s50 = scalar_select %p47, %s49, %s26
      %p51 = scmp.ge.s32.totalorder %s50, 2
      %s52 = scalar_select %p51, 0, %s50
      %s53 = ssub.s32 %s26, %s52
      %s54 = ssub.s32 %s27, %s48
      %s55 = sor.u32 %s53, %s54
      %s56 = ssub.s32 %s29, %s40
      %s57 = sor.u32 %s55, %s56
      %p58 = scmp.eq.s32.totalorder %s57, 0
      %s60 = sadd.s32 %s59, 1
      %s61 = scalar_select %p58, %s59, %s60
      %p64 = pneg %p58
      %p65 = scmp.eq.s32.totalorder %s19, 7
      %p66 = por %p64, %p65
      %p67 = scmp.ne.s32.totalorder %s59, %s62
      %p68 = scmp.eq.s32.totalorder %s19, 0
      %p69 = por %p67, %p68
      %p70 = scmp.ne.s32.totalorder %s59, %s62
      %p71 = scmp.eq.s32.totalorder %s24, 7
      %p72 = por %p70, %p71
      %p73 = scmp.ne.s32.totalorder %s62, %s63
      %p74 = scmp.eq.s32.totalorder %s24, 0
      %p75 = por %p73, %p74
      %p76 = scmp.ne.s32.totalorder %s62, %s63
      %p77 = scmp.eq.s32.totalorder %s25, 7
      %p78 = por %p76, %p77
      %p80 = scmp.ne.s32.totalorder %s63, %s79
      %p81 = scmp.eq.s32.totalorder %s25, 0
      %p82 = por %p80, %p81
      %s83 = ssub.s32 %s26, %s52
      %s84 = ssub.s32 %s29, %s40
      %s85 = sor.u32 %s83, %s84
      %s86 = ssub.s32 %s28, %s44
      %s87 = sor.u32 %s85, %s86
      %p88 = scmp.eq.s32.totalorder %s87, 0
      %s90 = sadd.s32 %s89, 1
      %s91 = scalar_select %p88, %s89, %s90
      %p94 = pneg %p88
      %p95 = scmp.eq.s32.totalorder %s19, 7
      %p96 = por %p94, %p95
      %p97 = scmp.ne.s32.totalorder %s89, %s92
      %p98 = scmp.eq.s32.totalorder %s19, 0
      %p99 = por %p97, %p98
      %p100 = scmp.ne.s32.totalorder %s89, %s92
      %p101 = scmp.eq.s32.totalorder %s24, 7
      %p102 = por %p100, %p101
      %p103 = scmp.ne.s32.totalorder %s92, %s93
      %p104 = scmp.eq.s32.totalorder %s24, 0
      %p105 = por %p103, %p104
      %p106 = scmp.ne.s32.totalorder %s92, %s93
      %p107 = scmp.eq.s32.totalorder %s25, 7
      %p108 = por %p106, %p107
      %p110 = scmp.ne.s32.totalorder %s93, %s109
      %p111 = scmp.eq.s32.totalorder %s25, 0
      %p112 = por %p110, %p111
      %s113 = ssub.s32 %s26, %s52
      %s114 = ssub.s32 %s28, %s44
      %s115 = sor.u32 %s113, %s114
      %p116 = scmp.eq.s32.totalorder %s115, 0
      %s118 = sadd.s32 %s117, 1
      %s119 = scalar_select %p116, %s117, %s118
      %p122 = pneg %p116
      %p123 = scmp.eq.s32.totalorder %s19, 7
      %p124 = por %p122, %p123
      %p125 = scmp.ne.s32.totalorder %s117, %s120
      %p126 = scmp.eq.s32.totalorder %s19, 0
      %p127 = por %p125, %p126
      %p128 = scmp.ne.s32.totalorder %s117, %s120
      %p129 = scmp.eq.s32.totalorder %s24, 7
      %p130 = por %p128, %p129
      %p131 = scmp.ne.s32.totalorder %s120, %s121
      %p132 = scmp.eq.s32.totalorder %s24, 0
      %p133 = por %p131, %p132
      %p134 = scmp.ne.s32.totalorder %s120, %s121
      %p135 = scmp.eq.s32.totalorder %s25, 7
      %p136 = por %p134, %p135
      %p138 = scmp.ne.s32.totalorder %s121, %s137
      %p139 = scmp.eq.s32.totalorder %s25, 0
      %p140 = por %p138, %p139
      %s141 = ssub.s32 %s26, %s52
      %s142 = ssub.s32 %s28, %s44
      %s143 = sor.u32 %s141, %s142
      %p144 = scmp.eq.s32.totalorder %s143, 0
      %s146 = sadd.s32 %s145, 1
      %s147 = scalar_select %p144, %s145, %s146
      %p150 = pneg %p144
      %p151 = scmp.eq.s32.totalorder %s19, 7
      %p152 = por %p150, %p151
      %p153 = scmp.ne.s32.totalorder %s145, %s148
      %p154 = scmp.eq.s32.totalorder %s19, 0
      %p155 = por %p153, %p154
      %p156 = scmp.ne.s32.totalorder %s145, %s148
      %p157 = scmp.eq.s32.totalorder %s24, 7
      %p158 = por %p156, %p157
      %p159 = scmp.ne.s32.totalorder %s148, %s149
      %p160 = scmp.eq.s32.totalorder %s24, 0
      %p161 = por %p159, %p160
      %p162 = scmp.ne.s32.totalorder %s148, %s149
      %p163 = scmp.eq.s32.totalorder %s25, 7
      %p164 = por %p162, %p163
      %p166 = scmp.ne.s32.totalorder %s149, %s165
      %p167 = scmp.eq.s32.totalorder %s25, 0
      %p168 = por %p166, %p167
      %s169 = ssub.s32 %s26, %s52
      %s170 = ssub.s32 %s27, %s48
      %s171 = sor.u32 %s169, %s170
      %s172 = ssub.s32 %s28, %s44
      %s173 = sor.u32 %s171, %s172
      %p174 = scmp.eq.s32.totalorder %s173, 0
      %s176 = sadd.s32 %s175, 1
      %s177 = scalar_select %p174, %s175, %s176
      %p180 = pneg %p174
      %p181 = scmp.eq.s32.totalorder %s19, 7
      %p182 = por %p180, %p181
      %p183 = scmp.ne.s32.totalorder %s175, %s178
      %p184 = scmp.eq.s32.totalorder %s19, 0
      %p185 = por %p183, %p184
      %p186 = scmp.ne.s32.totalorder %s175, %s178
      %p187 = scmp.eq.s32.totalorder %s24, 7
      %p188 = por %p186, %p187
      %p189 = scmp.ne.s32.totalorder %s178, %s179
      %p190 = scmp.eq.s32.totalorder %s24, 0
      %p191 = por %p189, %p190
      %p192 = scmp.ne.s32.totalorder %s178, %s179
      %p193 = scmp.eq.s32.totalorder %s25, 7
      %p194 = por %p192, %p193
      %p196 = scmp.ne.s32.totalorder %s179, %s195
      %p197 = scmp.eq.s32.totalorder %s25, 0
      %p198 = por %p196, %p197
      %p199 = scmp.le.s32.totalorder 1, %s19
      %p200 = scmp.lt.s32.totalorder %s19, 9
      %p201 = pnand %p199, %p200
      %p202 = pneg %p201
      // Predicated region
      $region9: #{tpu_custom_call.1} parent=5 // pred_check
        _
      $region10: #{tpu_custom_call.1} parent=5 // pred_check_branch
        %204 = sbr.rel (%p201) target = $region12
      $region11: #{tpu_custom_call.1} parent=5 // pred_region
        %s205 = ssub.s32 %s19, 1
      $region12: #{tpu_custom_call.1} parent=5 // pred_fallthru
        _
      %p206 = scmp.lt.s32.totalorder %s19, 8
      // Predicated region
      $region13: #{tpu_custom_call.1} parent=5 // pred_check
        %p207 = pneg %p206
      $region14: #{tpu_custom_call.1} parent=5 // pred_check_branch
        %209 = sbr.rel (%p207) target = $region16
      $region15: #{tpu_custom_call.1} parent=5 // pred_region
        // Predicated region
        $region17: #{tpu_custom_call.1} parent=15 // pred_check
          %p210 = pneg %p69
        $region18: #{tpu_custom_call.1} parent=15 // pred_check_branch
          %212 = sbr.rel (%p210) target = $region20
        $region19: #{tpu_custom_call.1} parent=15 // pred_region
          %s213 = sand.u32 %s59, 1
          %s214 = scalar_lea.sflag [#allocation4], %s213
          %s215 = sand.u32 %s59, 1
          %s216 = smul.addr %s215, 128
          %s217 = scalar_lea.vmem [#allocation3], %s216
          %s218 = smul.u32 16, %s27
          %s219 = smul.u32 2, %s29
          %221 = vsyncadd %s214, 0
          %s222 = smul.addr %s218, 2
          %s223 = sadd.s32 %s219, %s222
          %s224 = smul.addr %s26, 128
          %s225 = sadd.s32 %s223, %s224
          %s226 = smul.addr %s225, 4
          %s227 = scalar_lea.hbm %s0, %s226
          %s228 = sshll.u32 %s227, 4
          %s229 = int_to_ptr.hbm [resolvable:$true] %s228
          %s230 = sshll.u32 %s217, 4
          %s231 = int_to_ptr.vmem [resolvable:$true] %s230
          %236 = dma.hbm_to_vmem [thread:$0]  %s229, 2048, %s231, %s214, 128, 128, 8
        $region20: #{tpu_custom_call.1} parent=15 // pred_fallthru
          _
        // Predicated region
        $region21: #{tpu_custom_call.1} parent=15 // pred_check
          %p237 = pneg %p99
        $region22: #{tpu_custom_call.1} parent=15 // pred_check_branch
          %239 = sbr.rel (%p237) target = $region24
        $region23: #{tpu_custom_call.1} parent=15 // pred_region
          %s240 = sand.u32 %s19, 1
          %s241 = scalar_lea.sflag [#allocation7], %s240
          %s242 = sand.u32 %s89, 1
          %s243 = smul.addr %s242, 128
          %s244 = scalar_lea.vmem [#allocation6], %s243
          %s245 = smul.u32 32, %s29
          %247 = vsyncadd %s241, 0
          %s248 = sadd.s32 %s28, %s245
          %s249 = smul.addr %s26, 32
          %s250 = sadd.s32 %s248, %s249
          %s251 = smul.addr %s250, 4
          %s252 = scalar_lea.hbm %s1, %s251
          %s253 = sshll.u32 %s252, 4
          %s254 = int_to_ptr.hbm [resolvable:$true] %s253
          %s255 = sshll.u32 %s244, 4
          %s256 = int_to_ptr.vmem [resolvable:$true] %s255
          %261 = dma.hbm_to_vmem [thread:$0]  %s254, 2048, %s256, %s241, 64, 64, 4
        $region24: #{tpu_custom_call.1} parent=15 // pred_fallthru
          _
        // Predicated region
        $region25: #{tpu_custom_call.1} parent=15 // pred_check
          %p262 = pneg %p127
        $region26: #{tpu_custom_call.1} parent=15 // pred_check_branch
          %264 = sbr.rel (%p262) target = $region28
        $region27: #{tpu_custom_call.1} parent=15 // pred_region
          %s265 = sand.u32 %s19, 1
          %s266 = scalar_lea.sflag [#allocation7], %s265
          %s267 = sand.u32 %s117, 1
          %s268 = scalar_lea.vmem [#allocation8], %s267
          %270 = vsyncadd %s266, 0
          %s271 = sadd.s32 %s28, %s26
          %s272 = scalar_lea.hbm %s2, %s271
          %s274 = sshll.u32 %s272, 4
          %s275 = int_to_ptr.hbm [resolvable:$true] %s274
          %s276 = sshll.u32 %s268, 4
          %s277 = int_to_ptr.vmem [resolvable:$true] %s276
          %279 = dma.hbm_to_vmem [thread:$0]  %s275, 16, %s277, %s266
        $region28: #{tpu_custom_call.1} parent=15 // pred_fallthru
          _
        // Predicated region
        $region29: #{tpu_custom_call.1} parent=15 // pred_check
          %p280 = pneg %p155
        $region30: #{tpu_custom_call.1} parent=15 // pred_check_branch
          %282 = sbr.rel (%p280) target = $region32
        $region31: #{tpu_custom_call.1} parent=15 // pred_region
          %p283 = scmp.lt.s32.totalorder %s26, 1
          %s284 = scalar_select %p283, %s26, 1
          %p285 = scmp.lt.s32.totalorder %s28, 0
          %s286 = scalar_select %p285, %s28, 0
          %s287 = sadd.s32 %s286, %s284
          %s288 = scalar_lea.vmem %s3, %s287
        $region32: #{tpu_custom_call.1} parent=15 // pred_fallthru
          _
      $region16: #{tpu_custom_call.1} parent=5 // pred_fallthru
        _
      %p289 = scmp.le.s32.totalorder 1, %s19
      %p290 = scmp.lt.s32.totalorder %s19, 9
      %p291 = pnand %p289, %p290
      %p292 = pneg %p291
      // Predicated region
      $region33: #{tpu_custom_call.1} parent=5 // pred_check
        _
      $region34: #{tpu_custom_call.1} parent=5 // pred_check_branch
        %294 = sbr.rel (%p291) target = $region36
      $region35: #{tpu_custom_call.1} parent=5 // pred_region
        %s295 = ssub.s32 %s19, 1
        %s296 = sand.u32 %s62, 1
        %s297 = scalar_lea.sflag [#allocation4], %s296
        %s298 = sand.u32 %s62, 1
        %s299 = smul.addr %s298, 128
        %s300 = scalar_lea.vmem [#allocation3], %s299
        // Predicated region
        $region37: #{tpu_custom_call.1} parent=35 // pred_check
          %p301 = pneg %p75
        $region38: #{tpu_custom_call.1} parent=35 // pred_check_branch
          %303 = sbr.rel (%p301) target = $region40
        $region39: #{tpu_custom_call.1} parent=35 // pred_region
          %305 = dma.done %s297, 2048
        $region40: #{tpu_custom_call.1} parent=35 // pred_fallthru
          _
        %s306 = sand.u32 %s24, 1
        %s307 = scalar_lea.sflag [#allocation7], %s306
        %s308 = sand.u32 %s92, 1
        %s309 = smul.addr %s308, 128
        %s310 = scalar_lea.vmem [#allocation6], %s309
        // Predicated region
        $region41: #{tpu_custom_call.1} parent=35 // pred_check
          %p311 = pneg %p105
        $region42: #{tpu_custom_call.1} parent=35 // pred_check_branch
          %313 = sbr.rel (%p311) target = $region44
        $region43: #{tpu_custom_call.1} parent=35 // pred_region
          %315 = dma.done %s307, 2048
        $region44: #{tpu_custom_call.1} parent=35 // pred_fallthru
          _
        %s316 = sand.u32 %s24, 1
        %s317 = scalar_lea.sflag [#allocation7], %s316
        %s318 = sand.u32 %s120, 1
        %s319 = scalar_lea.vmem [#allocation8], %s318
        // Predicated region
        $region45: #{tpu_custom_call.1} parent=35 // pred_check
          %p320 = pneg %p133
        $region46: #{tpu_custom_call.1} parent=35 // pred_check_branch
          %322 = sbr.rel (%p320) target = $region48
        $region47: #{tpu_custom_call.1} parent=35 // pred_region
          %324 = dma.done %s317, 16
        $region48: #{tpu_custom_call.1} parent=35 // pred_fallthru
          _
        %s325 = sand.u32 %s62, 1
        %s326 = scalar_lea.sflag [#allocation4], %s325
        %s327 = sand.u32 %s62, 1
        %s328 = smul.addr %s327, 128
        %s329 = scalar_lea.vmem [#allocation3], %s328
        %p330 = pneg %p75
        %p331 = pneg %p72
        %s332 = sand.u32 %s24, 1
        %s333 = scalar_lea.sflag [#allocation7], %s332
        %s334 = sand.u32 %s92, 1
        %s335 = smul.addr %s334, 128
        %s336 = scalar_lea.vmem [#allocation6], %s335
        %p337 = pneg %p105
        %p338 = pneg %p102
        %s339 = sand.u32 %s24, 1
        %s340 = scalar_lea.sflag [#allocation7], %s339
        %s341 = sand.u32 %s120, 1
        %s342 = scalar_lea.vmem [#allocation8], %s341
        %p343 = pneg %p133
        %p344 = pneg %p130
        %p345 = scmp.lt.s32.totalorder %s30, 1
        %s346 = scalar_select %p345, %s30, 1
        %p347 = scmp.lt.s32.totalorder %s32, 0
        %s348 = scalar_select %p347, %s32, 0
        %s349 = sadd.s32 %s348, %s346
        %s350 = scalar_lea.vmem %s3, %s349
        %p351 = pneg %p161
        %p352 = pneg %p158
        %p353 = pneg %p191
        %p354 = pneg %p188
        %s355 = sand.u32 %s178, 1
        %s356 = scalar_lea.sflag [#allocation5], %s355
        %s357 = sand.u32 %s178, 1
        %s358 = smul.addr %s357, 64
        %s359 = scalar_lea.vmem [#allocation9], %s358
        %s360 = smul.u32 16, %s31
        %s361 = smul.u32 2, %s33
        %s362 = smul.u32 32, %s33
        %p363 = scmp.lt.s32.totalorder %s30, 1
        %s364 = scalar_select %p363, %s30, 1
        %p365 = scmp.lt.s32.totalorder %s32, 0
        %s366 = scalar_select %p365, %s32, 0
        %s367 = sadd.s32 %s366, %s364
        %s368 = scalar_lea.vmem %s3, %s367
        %s369 = smul.u32 16, %s31
        %p370 = scmp.eq.s32.totalorder %s33, 0
        // Predicated region
        $region49: #{tpu_custom_call.1} parent=35 // pred_check
          %p371 = pneg %p370
        $region50: #{tpu_custom_call.1} parent=35 // pred_check_branch
          %373 = sbr.rel (%p371) target = $region52
        $region51: #{tpu_custom_call.1} parent=35 // pred_region
          %374 = vst [vmem:[#allocation2] sm:$0xff] 0.0
          %375 = vst [vmem:[#allocation2 + $0x8] sm:$0xff] 0.0
          %376 = vst [vmem:[#allocation2 + $0x10] sm:$0xff] 0.0
          %377 = vst [vmem:[#allocation2 + $0x18] sm:$0xff] 0.0
          %378 = vst [vmem:[#allocation2 + $0x20] sm:$0xff] 0.0
          %379 = vst [vmem:[#allocation2 + $0x28] sm:$0xff] 0.0
          %380 = vst [vmem:[#allocation2 + $0x30] sm:$0xff] 0.0
          %381 = vst [vmem:[#allocation2 + $0x38] sm:$0xff] 0.0
          %382 = vst [vmem:[#allocation2 + $0x40] sm:$0xff] 0.0
          %383 = vst [vmem:[#allocation2 + $0x48] sm:$0xff] 0.0
          %384 = vst [vmem:[#allocation2 + $0x50] sm:$0xff] 0.0
          %385 = vst [vmem:[#allocation2 + $0x58] sm:$0xff] 0.0
          %386 = vst [vmem:[#allocation2 + $0x60] sm:$0xff] 0.0
          %387 = vst [vmem:[#allocation2 + $0x68] sm:$0xff] 0.0
          %388 = vst [vmem:[#allocation2 + $0x70] sm:$0xff] 0.0
          %389 = vst [vmem:[#allocation2 + $0x78] sm:$0xff] 0.0
        $region52: #{tpu_custom_call.1} parent=35 // pred_fallthru
          _
        %v390 = vld [vmem:[#allocation2] sm:$0xff]
        %v391 = vld [vmem:[#allocation2 + $0x8] sm:$0xff]
        %v392 = vld [vmem:[#allocation2 + $0x10] sm:$0xff]
        %v393 = vld [vmem:[#allocation2 + $0x18] sm:$0xff]
        %v394 = vld [vmem:[#allocation2 + $0x20] sm:$0xff]
        %v395 = vld [vmem:[#allocation2 + $0x28] sm:$0xff]
        %v396 = vld [vmem:[#allocation2 + $0x30] sm:$0xff]
        %v397 = vld [vmem:[#allocation2 + $0x38] sm:$0xff]
        %v398 = vld [vmem:[#allocation2 + $0x40] sm:$0xff]
        %v399 = vld [vmem:[#allocation2 + $0x48] sm:$0xff]
        %v400 = vld [vmem:[#allocation2 + $0x50] sm:$0xff]
        %v401 = vld [vmem:[#allocation2 + $0x58] sm:$0xff]
        %v402 = vld [vmem:[#allocation2 + $0x60] sm:$0xff]
        %v403 = vld [vmem:[#allocation2 + $0x68] sm:$0xff]
        %v404 = vld [vmem:[#allocation2 + $0x70] sm:$0xff]
        %v405 = vld [vmem:[#allocation2 + $0x78] sm:$0xff]
        %v406 = vld [vmem:[%s300] sm:$0xff]
        %v407 = vld [vmem:[%s300 + $0x8] sm:$0xff]
        %v408 = vld [vmem:[%s300 + $0x10] sm:$0xff]
        %v409 = vld [vmem:[%s300 + $0x18] sm:$0xff]
        %v410 = vld [vmem:[%s300 + $0x20] sm:$0xff]
        %v411 = vld [vmem:[%s300 + $0x28] sm:$0xff]
        %v412 = vld [vmem:[%s300 + $0x30] sm:$0xff]
        %v413 = vld [vmem:[%s300 + $0x38] sm:$0xff]
        %v414 = vld [vmem:[%s300 + $0x40] sm:$0xff]
        %v415 = vld [vmem:[%s300 + $0x48] sm:$0xff]
        %v416 = vld [vmem:[%s300 + $0x50] sm:$0xff]
        %v417 = vld [vmem:[%s300 + $0x58] sm:$0xff]
        %v418 = vld [vmem:[%s300 + $0x60] sm:$0xff]
        %v419 = vld [vmem:[%s300 + $0x68] sm:$0xff]
        %v420 = vld [vmem:[%s300 + $0x70] sm:$0xff]
        %v421 = vld [vmem:[%s300 + $0x78] sm:$0xff]
        %v422 = vld [vmem:[%s310] sm:$0xf]
        %v423 = vld [vmem:[%s310 + $0x4] sm:$0xf]
        %v424 = vld [vmem:[%s310 + $0x8] sm:$0xf]
        %v425 = vld [vmem:[%s310 + $0xc] sm:$0xf]
        %v426 = vld [vmem:[%s310 + $0x10] sm:$0xf]
        %v427 = vld [vmem:[%s310 + $0x14] sm:$0xf]
        %v428 = vld [vmem:[%s310 + $0x18] sm:$0xf]
        %v429 = vld [vmem:[%s310 + $0x1c] sm:$0xf]
        %v430 = vld [vmem:[%s310 + $0x20] sm:$0xf]
        %v431 = vld [vmem:[%s310 + $0x24] sm:$0xf]
        %v432 = vld [vmem:[%s310 + $0x28] sm:$0xf]
        %v433 = vld [vmem:[%s310 + $0x2c] sm:$0xf]
        %v434 = vld [vmem:[%s310 + $0x30] sm:$0xf]
        %v435 = vld [vmem:[%s310 + $0x34] sm:$0xf]
        %v436 = vld [vmem:[%s310 + $0x38] sm:$0xf]
        %v437 = vld [vmem:[%s310 + $0x3c] sm:$0xf]
        %v438 = vld [vmem:[%s310 + $0x40] sm:$0xf]
        %v439 = vld [vmem:[%s310 + $0x44] sm:$0xf]
        %v440 = vld [vmem:[%s310 + $0x48] sm:$0xf]
        %v441 = vld [vmem:[%s310 + $0x4c] sm:$0xf]
        %v442 = vld [vmem:[%s310 + $0x50] sm:$0xf]
        %v443 = vld [vmem:[%s310 + $0x54] sm:$0xf]
        %v444 = vld [vmem:[%s310 + $0x58] sm:$0xf]
        %v445 = vld [vmem:[%s310 + $0x5c] sm:$0xf]
        %v446 = vld [vmem:[%s310 + $0x60] sm:$0xf]
        %v447 = vld [vmem:[%s310 + $0x64] sm:$0xf]
        %v448 = vld [vmem:[%s310 + $0x68] sm:$0xf]
        %v449 = vld [vmem:[%s310 + $0x6c] sm:$0xf]
        %v450 = vld [vmem:[%s310 + $0x70] sm:$0xf]
        %v451 = vld [vmem:[%s310 + $0x74] sm:$0xf]
        %v452 = vld [vmem:[%s310 + $0x78] sm:$0xf]
        %v453 = vld [vmem:[%s310 + $0x7c] sm:$0xf]
        %v470 = vunpack.c.l.b16 %v406
        %v471 = vunpack.c.h.b16 %v406
        %v472 = vunpack.c.l.b16 %v407
        %v473 = vunpack.c.h.b16 %v407
        %v474 = vunpack.c.l.b16 %v408
        %v475 = vunpack.c.h.b16 %v408
        %v476 = vunpack.c.l.b16 %v409
        %v477 = vunpack.c.h.b16 %v409
        %v478 = vunpack.c.l.b16 %v410
        %v479 = vunpack.c.h.b16 %v410
        %v480 = vunpack.c.l.b16 %v411
        %v481 = vunpack.c.h.b16 %v411
        %v482 = vunpack.c.l.b16 %v412
        %v483 = vunpack.c.h.b16 %v412
        %v484 = vunpack.c.l.b16 %v413
        %v485 = vunpack.c.h.b16 %v413
        %v486 = vunpack.c.l.b16 %v414
        %v487 = vunpack.c.h.b16 %v414
        %v488 = vunpack.c.l.b16 %v415
        %v489 = vunpack.c.h.b16 %v415
        %v490 = vunpack.c.l.b16 %v416
        %v491 = vunpack.c.h.b16 %v416
        %v492 = vunpack.c.l.b16 %v417
        %v493 = vunpack.c.h.b16 %v417
        %v494 = vunpack.c.l.b16 %v418
        %v495 = vunpack.c.h.b16 %v418
        %v496 = vunpack.c.l.b16 %v419
        %v497 = vunpack.c.h.b16 %v419
        %v498 = vunpack.c.l.b16 %v420
        %v499 = vunpack.c.h.b16 %v420
        %v500 = vunpack.c.l.b16 %v421
        %v501 = vunpack.c.h.b16 %v421
        %v502 = vpack.c.b16 %v472, %v470
        %v503 = vpack.c.b16 %v473, %v471
        %v504 = vpack.c.b16 %v476, %v474
        %v505 = vpack.c.b16 %v477, %v475
        %v506 = vpack.c.b16 %v480, %v478
        %v507 = vpack.c.b16 %v481, %v479
        %v508 = vpack.c.b16 %v484, %v482
        %v509 = vpack.c.b16 %v485, %v483
        %v510 = vpack.c.b16 %v488, %v486
        %v511 = vpack.c.b16 %v489, %v487
        %v512 = vpack.c.b16 %v492, %v490
        %v513 = vpack.c.b16 %v493, %v491
        %v514 = vpack.c.b16 %v496, %v494
        %v515 = vpack.c.b16 %v497, %v495
        %v516 = vpack.c.b16 %v500, %v498
        %v517 = vpack.c.b16 %v501, %v499
        %v566 = vunpack.c.l.b16 %v422
        %v567 = vunpack.c.l.b16 %v423
        %v568 = vunpack.c.l.b16 %v424
        %v569 = vunpack.c.l.b16 %v425
        %v570 = vunpack.c.l.b16 %v426
        %v571 = vunpack.c.l.b16 %v427
        %v572 = vunpack.c.l.b16 %v428
        %v573 = vunpack.c.l.b16 %v429
        %v574 = vunpack.c.l.b16 %v430
        %v575 = vunpack.c.l.b16 %v431
        %v576 = vunpack.c.l.b16 %v432
        %v577 = vunpack.c.l.b16 %v433
        %v578 = vunpack.c.l.b16 %v434
        %v579 = vunpack.c.l.b16 %v435
        %v580 = vunpack.c.l.b16 %v436
        %v581 = vunpack.c.l.b16 %v437
        %v582 = vunpack.c.l.b16 %v438
        %v583 = vunpack.c.l.b16 %v439
        %v584 = vunpack.c.l.b16 %v440
        %v585 = vunpack.c.l.b16 %v441
        %v586 = vunpack.c.l.b16 %v442
        %v587 = vunpack.c.l.b16 %v443
        %v588 = vunpack.c.l.b16 %v444
        %v589 = vunpack.c.l.b16 %v445
        %v590 = vunpack.c.l.b16 %v446
        %v591 = vunpack.c.l.b16 %v447
        %v592 = vunpack.c.l.b16 %v448
        %v593 = vunpack.c.l.b16 %v449
        %v594 = vunpack.c.l.b16 %v450
        %v595 = vunpack.c.l.b16 %v451
        %v596 = vunpack.c.l.b16 %v452
        %v597 = vunpack.c.l.b16 %v453
        %v598 = vpack.c.b16 %v567, %v566
        %v599 = vpack.c.b16 %v569, %v568
        %v600 = vpack.c.b16 %v571, %v570
        %v601 = vpack.c.b16 %v573, %v572
        %v602 = vpack.c.b16 %v575, %v574
        %v603 = vpack.c.b16 %v577, %v576
        %v604 = vpack.c.b16 %v579, %v578
        %v605 = vpack.c.b16 %v581, %v580
        %v606 = vpack.c.b16 %v583, %v582
        %v607 = vpack.c.b16 %v585, %v584
        %v608 = vpack.c.b16 %v587, %v586
        %v609 = vpack.c.b16 %v589, %v588
        %v610 = vpack.c.b16 %v591, %v590
        %v611 = vpack.c.b16 %v593, %v592
        %v612 = vpack.c.b16 %v595, %v594
        %v613 = vpack.c.b16 %v597, %v596
        %630 = vmatpush.bf16.msra.mxu0 %v605
        %631 = vmatpush.bf16.msra.mxu0 %v604
        %632 = vmatpush.bf16.msra.mxu0 %v603
        %633 = vmatpush.bf16.msra.mxu0 %v602
        %634 = vmatpush.bf16.msra.mxu0 %v601
        %635 = vmatpush.bf16.msra.mxu0 %v600
        %636 = vmatpush.bf16.msra.mxu0 %v599
        %637 = vmatpush.bf16.msra.mxu0 %v598
        %638 = vmatmul.bf16.gmra.mxu0 %v502
        %v639 = vpop.f32.mrf.mxu0
        %v640 = vadd.f32 0.0, %v639
        %v641 = vpop.f32.mrf.mxu0
        %v642 = vadd.f32 0.0, %v641
        %643 = vmatmul.bf16.gmra.mxu0 %v504
        %v644 = vpop.f32.mrf.mxu0
        %v645 = vadd.f32 0.0, %v644
        %v646 = vpop.f32.mrf.mxu0
        %v647 = vadd.f32 0.0, %v646
        %648 = vmatmul.bf16.gmra.mxu0 %v506
        %v649 = vpop.f32.mrf.mxu0
        %v650 = vadd.f32 0.0, %v649
        %v651 = vpop.f32.mrf.mxu0
        %v652 = vadd.f32 0.0, %v651
        %653 = vmatmul.bf16.gmra.mxu0 %v508
        %v654 = vpop.f32.mrf.mxu0
        %v655 = vadd.f32 0.0, %v654
        %v656 = vpop.f32.mrf.mxu0
        %v657 = vadd.f32 0.0, %v656
        %658 = vmatmul.bf16.gmra.mxu0 %v510
        %v659 = vpop.f32.mrf.mxu0
        %v660 = vadd.f32 0.0, %v659
        %v661 = vpop.f32.mrf.mxu0
        %v662 = vadd.f32 0.0, %v661
        %663 = vmatmul.bf16.gmra.mxu0 %v512
        %v664 = vpop.f32.mrf.mxu0
        %v665 = vadd.f32 0.0, %v664
        %v666 = vpop.f32.mrf.mxu0
        %v667 = vadd.f32 0.0, %v666
        %668 = vmatmul.bf16.gmra.mxu0 %v514
        %v669 = vpop.f32.mrf.mxu0
        %v670 = vadd.f32 0.0, %v669
        %v671 = vpop.f32.mrf.mxu0
        %v672 = vadd.f32 0.0, %v671
        %673 = vmatmul.bf16.gmra.mxu0 %v516
        %v674 = vpop.f32.mrf.mxu0
        %v675 = vadd.f32 0.0, %v674
        %v676 = vpop.f32.mrf.mxu0
        %v677 = vadd.f32 0.0, %v676
        %678 = vdwg.mxu0
        %679 = vmatpush.bf16.msra.mxu0 %v613
        %680 = vmatpush.bf16.msra.mxu0 %v612
        %681 = vmatpush.bf16.msra.mxu0 %v611
        %682 = vmatpush.bf16.msra.mxu0 %v610
        %683 = vmatpush.bf16.msra.mxu0 %v609
        %684 = vmatpush.bf16.msra.mxu0 %v608
        %685 = vmatpush.bf16.msra.mxu0 %v607
        %686 = vmatpush.bf16.msra.mxu0 %v606
        %687 = vmatmul.bf16.gmra.mxu0 %v503
        %v688 = vpop.f32.mrf.mxu0
        %v689 = vadd.f32 %v640, %v688
        %v690 = vpop.f32.mrf.mxu0
        %v691 = vadd.f32 %v642, %v690
        %692 = vmatmul.bf16.gmra.mxu0 %v505
        %v693 = vpop.f32.mrf.mxu0
        %v694 = vadd.f32 %v645, %v693
        %v695 = vpop.f32.mrf.mxu0
        %v696 = vadd.f32 %v647, %v695
        %697 = vmatmul.bf16.gmra.mxu0 %v507
        %v698 = vpop.f32.mrf.mxu0
        %v699 = vadd.f32 %v650, %v698
        %v700 = vpop.f32.mrf.mxu0
        %v701 = vadd.f32 %v652, %v700
        %702 = vmatmul.bf16.gmra.mxu0 %v509
        %v703 = vpop.f32.mrf.mxu0
        %v704 = vadd.f32 %v655, %v703
        %v705 = vpop.f32.mrf.mxu0
        %v706 = vadd.f32 %v657, %v705
        %707 = vmatmul.bf16.gmra.mxu0 %v511
        %v708 = vpop.f32.mrf.mxu0
        %v709 = vadd.f32 %v660, %v708
        %v710 = vpop.f32.mrf.mxu0
        %v711 = vadd.f32 %v662, %v710
        %712 = vmatmul.bf16.gmra.mxu0 %v513
        %v713 = vpop.f32.mrf.mxu0
        %v714 = vadd.f32 %v665, %v713
        %v715 = vpop.f32.mrf.mxu0
        %v716 = vadd.f32 %v667, %v715
        %717 = vmatmul.bf16.gmra.mxu0 %v515
        %v718 = vpop.f32.mrf.mxu0
        %v719 = vadd.f32 %v670, %v718
        %v720 = vpop.f32.mrf.mxu0
        %v721 = vadd.f32 %v672, %v720
        %722 = vmatmul.bf16.gmra.mxu0 %v517
        %v723 = vpop.f32.mrf.mxu0
        %v724 = vadd.f32 %v675, %v723
        %v725 = vpop.f32.mrf.mxu0
        %v726 = vadd.f32 %v677, %v725
        %727 = vdwg.mxu0
        %v728 = vadd.f32 %v390, %v689
        %v729 = vadd.f32 %v391, %v691
        %v730 = vadd.f32 %v392, %v694
        %v731 = vadd.f32 %v393, %v696
        %v732 = vadd.f32 %v394, %v699
        %v733 = vadd.f32 %v395, %v701
        %v734 = vadd.f32 %v396, %v704
        %v735 = vadd.f32 %v397, %v706
        %v736 = vadd.f32 %v398, %v709
        %v737 = vadd.f32 %v399, %v711
        %v738 = vadd.f32 %v400, %v714
        %v739 = vadd.f32 %v401, %v716
        %v740 = vadd.f32 %v402, %v719
        %v741 = vadd.f32 %v403, %v721
        %v742 = vadd.f32 %v404, %v724
        %v743 = vadd.f32 %v405, %v726
        %744 = vst [vmem:[#allocation2] sm:$0xff] %v728
        %745 = vst [vmem:[#allocation2 + $0x8] sm:$0xff] %v729
        %746 = vst [vmem:[#allocation2 + $0x10] sm:$0xff] %v730
        %747 = vst [vmem:[#allocation2 + $0x18] sm:$0xff] %v731
        %748 = vst [vmem:[#allocation2 + $0x20] sm:$0xff] %v732
        %749 = vst [vmem:[#allocation2 + $0x28] sm:$0xff] %v733
        %750 = vst [vmem:[#allocation2 + $0x30] sm:$0xff] %v734
        %751 = vst [vmem:[#allocation2 + $0x38] sm:$0xff] %v735
        %752 = vst [vmem:[#allocation2 + $0x40] sm:$0xff] %v736
        %753 = vst [vmem:[#allocation2 + $0x48] sm:$0xff] %v737
        %754 = vst [vmem:[#allocation2 + $0x50] sm:$0xff] %v738
        %755 = vst [vmem:[#allocation2 + $0x58] sm:$0xff] %v739
        %756 = vst [vmem:[#allocation2 + $0x60] sm:$0xff] %v740
        %757 = vst [vmem:[#allocation2 + $0x68] sm:$0xff] %v741
        %758 = vst [vmem:[#allocation2 + $0x70] sm:$0xff] %v742
        %759 = vst [vmem:[#allocation2 + $0x78] sm:$0xff] %v743
        // Predicated region
        $region53: #{tpu_custom_call.1} parent=35 // pred_check
          %p760 = pneg %p370
        $region54: #{tpu_custom_call.1} parent=35 // pred_check_branch
          %762 = sbr.rel (%p760) target = $region56
        $region55: #{tpu_custom_call.1} parent=35 // pred_region
          %v763 = vld [vmem:[#allocation2] sm:$0xff]
          %v764 = vld [vmem:[#allocation2 + $0x8] sm:$0xff]
          %v765 = vld [vmem:[#allocation2 + $0x10] sm:$0xff]
          %v766 = vld [vmem:[#allocation2 + $0x18] sm:$0xff]
          %v767 = vld [vmem:[#allocation2 + $0x20] sm:$0xff]
          %v768 = vld [vmem:[#allocation2 + $0x28] sm:$0xff]
          %v769 = vld [vmem:[#allocation2 + $0x30] sm:$0xff]
          %v770 = vld [vmem:[#allocation2 + $0x38] sm:$0xff]
          %v771 = vld [vmem:[#allocation2 + $0x40] sm:$0xff]
          %v772 = vld [vmem:[#allocation2 + $0x48] sm:$0xff]
          %v773 = vld [vmem:[#allocation2 + $0x50] sm:$0xff]
          %v774 = vld [vmem:[#allocation2 + $0x58] sm:$0xff]
          %v775 = vld [vmem:[#allocation2 + $0x60] sm:$0xff]
          %v776 = vld [vmem:[#allocation2 + $0x68] sm:$0xff]
          %v777 = vld [vmem:[#allocation2 + $0x70] sm:$0xff]
          %v778 = vld [vmem:[#allocation2 + $0x78] sm:$0xff]
          %v779 = vld [vmem:[%s319] sm:$0x1]
          %v781 = vperm.slane %v779, 0
          %v783 = vmul.f32 %v763, %v781
          %v784 = vmul.f32 %v764, %v781
          %v785 = vmul.f32 %v765, %v781
          %v786 = vmul.f32 %v766, %v781
          %v787 = vmul.f32 %v767, %v781
          %v788 = vmul.f32 %v768, %v781
          %v789 = vmul.f32 %v769, %v781
          %v790 = vmul.f32 %v770, %v781
          %v791 = vmul.f32 %v771, %v781
          %v792 = vmul.f32 %v772, %v781
          %v793 = vmul.f32 %v773, %v781
          %v794 = vmul.f32 %v774, %v781
          %v795 = vmul.f32 %v775, %v781
          %v796 = vmul.f32 %v776, %v781
          %v797 = vmul.f32 %v777, %v781
          %v798 = vmul.f32 %v778, %v781
          %v799 = vld [vmem:[%s368] sm:$0x1]
          %v801 = vperm.slane %v799, 0
          %v803 = vadd.f32 %v783, %v801
          %v804 = vadd.f32 %v784, %v801
          %v805 = vadd.f32 %v785, %v801
          %v806 = vadd.f32 %v786, %v801
          %v807 = vadd.f32 %v787, %v801
          %v808 = vadd.f32 %v788, %v801
          %v809 = vadd.f32 %v789, %v801
          %v810 = vadd.f32 %v790, %v801
          %v811 = vadd.f32 %v791, %v801
          %v812 = vadd.f32 %v792, %v801
          %v813 = vadd.f32 %v793, %v801
          %v814 = vadd.f32 %v794, %v801
          %v815 = vadd.f32 %v795, %v801
          %v816 = vadd.f32 %v796, %v801
          %v817 = vadd.f32 %v797, %v801
          %v818 = vadd.f32 %v798, %v801
          %v819 = vmax.f32 %v803, 0.0
          %v820 = vmax.f32 %v804, 0.0
          %v821 = vmax.f32 %v805, 0.0
          %v822 = vmax.f32 %v806, 0.0
          %v823 = vmax.f32 %v807, 0.0
          %v824 = vmax.f32 %v808, 0.0
          %v825 = vmax.f32 %v809, 0.0
          %v826 = vmax.f32 %v810, 0.0
          %v827 = vmax.f32 %v811, 0.0
          %v828 = vmax.f32 %v812, 0.0
          %v829 = vmax.f32 %v813, 0.0
          %v830 = vmax.f32 %v814, 0.0
          %v831 = vmax.f32 %v815, 0.0
          %v832 = vmax.f32 %v816, 0.0
          %v833 = vmax.f32 %v817, 0.0
          %v834 = vmax.f32 %v818, 0.0
          %v835 = vpack.c.bf16 %v819, %v819
          %v836 = vpack.c.bf16 %v820, %v820
          %v837 = vpack.c.bf16 %v821, %v821
          %v838 = vpack.c.bf16 %v822, %v822
          %v839 = vpack.c.bf16 %v823, %v823
          %v840 = vpack.c.bf16 %v824, %v824
          %v841 = vpack.c.bf16 %v825, %v825
          %v842 = vpack.c.bf16 %v826, %v826
          %v843 = vpack.c.bf16 %v827, %v827
          %v844 = vpack.c.bf16 %v828, %v828
          %v845 = vpack.c.bf16 %v829, %v829
          %v846 = vpack.c.bf16 %v830, %v830
          %v847 = vpack.c.bf16 %v831, %v831
          %v848 = vpack.c.bf16 %v832, %v832
          %v849 = vpack.c.bf16 %v833, %v833
          %v850 = vpack.c.bf16 %v834, %v834
          %851 = vst [vmem:[%s359] sm:$0xf] %v835
          %852 = vst [vmem:[%s359 + $0x4] sm:$0xf] %v836
          %853 = vst [vmem:[%s359 + $0x8] sm:$0xf] %v837
          %854 = vst [vmem:[%s359 + $0xc] sm:$0xf] %v838
          %855 = vst [vmem:[%s359 + $0x10] sm:$0xf] %v839
          %856 = vst [vmem:[%s359 + $0x14] sm:$0xf] %v840
          %857 = vst [vmem:[%s359 + $0x18] sm:$0xf] %v841
          %858 = vst [vmem:[%s359 + $0x1c] sm:$0xf] %v842
          %859 = vst [vmem:[%s359 + $0x20] sm:$0xf] %v843
          %860 = vst [vmem:[%s359 + $0x24] sm:$0xf] %v844
          %861 = vst [vmem:[%s359 + $0x28] sm:$0xf] %v845
          %862 = vst [vmem:[%s359 + $0x2c] sm:$0xf] %v846
          %863 = vst [vmem:[%s359 + $0x30] sm:$0xf] %v847
          %864 = vst [vmem:[%s359 + $0x34] sm:$0xf] %v848
          %865 = vst [vmem:[%s359 + $0x38] sm:$0xf] %v849
          %866 = vst [vmem:[%s359 + $0x3c] sm:$0xf] %v850
        $region56: #{tpu_custom_call.1} parent=35 // pred_fallthru
          _
        %s867 = sand.u32 %s178, 1
        %s868 = scalar_lea.sflag [#allocation5], %s867
        %s869 = sand.u32 %s178, 1
        %s870 = smul.addr %s869, 64
        %s871 = scalar_lea.vmem [#allocation9], %s870
        // Predicated region
        $region57: #{tpu_custom_call.1} parent=35 // pred_check
          %p872 = pneg %p188
        $region58: #{tpu_custom_call.1} parent=35 // pred_check_branch
          %874 = sbr.rel (%p872) target = $region60
        $region59: #{tpu_custom_call.1} parent=35 // pred_region
          %s875 = smul.u32 16, %s31
          %877 = vsyncadd %s868, 0
          %s878 = sadd.s32 %s32, %s875
          %s879 = smul.addr %s30, 64
          %s880 = sadd.s32 %s878, %s879
          %s881 = smul.addr %s880, 4
          %s882 = scalar_lea.hbm %s4, %s881
          %s883 = sshll.u32 %s871, 4
          %s884 = int_to_ptr.vmem [resolvable:$true] %s883
          %s885 = sshll.u32 %s882, 4
          %s886 = int_to_ptr.hbm [resolvable:$true] %s885
          %891 = dma.vmem_to_hbm [thread:$0]  %s884, 1024, %s886, %s868, 64, 64, 4
        $region60: #{tpu_custom_call.1} parent=35 // pred_fallthru
          _
      $region36: #{tpu_custom_call.1} parent=5 // pred_fallthru
        _
      %p892 = scmp.le.s32.totalorder 2, %s19
      // Predicated region
      $region61: #{tpu_custom_call.1} parent=5 // pred_check
        %p893 = pneg %p892
      $region62: #{tpu_custom_call.1} parent=5 // pred_check_branch
        %895 = sbr.rel (%p893) target = $region64
      $region63: #{tpu_custom_call.1} parent=5 // pred_region
        %s896 = ssub.s32 %s19, 2
        // Predicated region
        $region65: #{tpu_custom_call.1} parent=63 // pred_check
          %p897 = pneg %p194
        $region66: #{tpu_custom_call.1} parent=63 // pred_check_branch
          %899 = sbr.rel (%p897) target = $region68
        $region67: #{tpu_custom_call.1} parent=63 // pred_region
          %s900 = sand.u32 %s179, 1
          %s901 = scalar_lea.sflag [#allocation5], %s900
          %s902 = sand.u32 %s179, 1
          %s903 = smul.addr %s902, 64
          %s904 = scalar_lea.vmem [#allocation9], %s903
          %906 = dma.done %s901, 1024
        $region68: #{tpu_custom_call.1} parent=63 // pred_fallthru
          _
      $region64: #{tpu_custom_call.1} parent=5 // pred_fallthru
        _
    $region6: #{tpu_custom_call.1} parent=1 // loop_footer
      %s23 = sadd.s32 1, %s19
    $region7: #{tpu_custom_call.1} parent=1 // loop_footer_branch
      %18 = sbr.rel target = $region3
    $region8: #{tpu_custom_call.1} parent=1 // loop_exit
      _
    %907 = vsyncpa [#allocation4], 1
    %s908 = scalar_lea.sflag [#allocation4], 1
    %909 = vsyncpa %s908, 1
    %910 = vsyncpa [#allocation7], 1
    %s911 = scalar_lea.sflag [#allocation7], 1
    %912 = vsyncpa %s911, 1
    %913 = vsyncpa [#allocation5], 1
    %s914 = scalar_lea.sflag [#allocation5], 1
    %915 = vsyncpa %s914, 1

</llo_original>
